<compile_context>
chip_gen: v6e
topology: v6e:2x2x1
jax: 0.10.0
libtpu: 0.0.40
codegen_flags: <defaults>
</compile_context>

<pallas_src>
import math

import jax
import jax.numpy as jnp
from jax.experimental import pallas as pl
from jax.experimental.pallas import tpu as pltpu


def _pos_enc_kernel(x_ref, pe_ref, o_ref):
    # x_ref: (b_tile, seq_tile, d_model), pe_ref: (seq_tile, d_model)
    x = x_ref[...].astype(jnp.float32)
    pe = pe_ref[...].astype(jnp.float32)
    o_ref[...] = (x + pe[None, :, :]).astype(o_ref.dtype)


def _choose_tiles(batch, seq, d_model, itemsize, max_block_bytes):
    """Pick (b_tile, seq_tile) that divide (batch, seq) exactly and fit VMEM."""
    row_bytes = d_model * itemsize
    max_rows = max(1, max_block_bytes // row_bytes)

    if seq <= max_rows:
        seq_tile = seq                       # full seq per block
        b_cap = max(1, max_rows // seq)
        b_tile = 1
        for t in range(1, batch + 1):        # largest divisor of batch that fits
            if batch % t == 0 and t <= b_cap:
                b_tile = t
    else:
        b_tile = 1
        seq_tile = None
        for t in range(8, seq + 1, 8):       # largest multiple-of-8 divisor that fits
            if seq % t == 0 and t <= max_rows:
                seq_tile = t
        if seq_tile is None:
            # No suitable divisor: fall back to whole sequence per block rather
            # than padding x in HBM (rare; just needs a larger VMEM limit).
            seq_tile = seq
    return b_tile, seq_tile


def positional_encoding(x, pe, start_pos=0, *, max_block_bytes=4 * 1024 * 1024):
    """out = x + pe[start_pos:start_pos + seq_len][None]   (eval-mode forward).

    x  : (batch, seq, d_model)
    pe : (max_len, d_model) sinusoidal table
    start_pos : python int (static), as in the PyTorch module.
    """
    # TODO(synk): training-mode dropout (p > 0) is not applied; eval-mode
    # forward makes dropout the identity. Could be added in-kernel via
    # pltpu.prng_seed / pltpu.prng_random_bits if training support is needed.
    batch, seq, d_model = x.shape
    pe_slice = pe[start_pos:start_pos + seq, :]        # static slice, negligible cost

    itemsize = jnp.dtype(x.dtype).itemsize
    b_tile, seq_tile = _choose_tiles(batch, seq, d_model, itemsize, max_block_bytes)
    grid = (batch // b_tile, seq // seq_tile)

    # VMEM sizing: double-buffered x block + out block + (small) pe block.
    blk_bytes = b_tile * seq_tile * d_model * itemsize
    pe_bytes = seq_tile * d_model * jnp.dtype(pe_slice.dtype).itemsize
    needed = 2 * 2 * blk_bytes + 2 * pe_bytes
    vmem_limit = int(min(64 * 1024 * 1024, max(2 * needed, 16 * 1024 * 1024)))

    cost = pl.CostEstimate(
        flops=batch * seq * d_model,
        transcendentals=0,
        bytes_accessed=2 * batch * seq * d_model * itemsize
        + seq * d_model * jnp.dtype(pe_slice.dtype).itemsize,
    )

    return pl.pallas_call(
        _pos_enc_kernel,
        out_shape=jax.ShapeDtypeStruct((batch, seq, d_model), x.dtype),
        grid_spec=pltpu.PrefetchScalarGridSpec(
            num_scalar_prefetch=0,
            grid=grid,
            in_specs=[
                pl.BlockSpec((b_tile, seq_tile, d_model), lambda b, s: (b, s, 0)),
                pl.BlockSpec((seq_tile, d_model), lambda b, s: (s, 0)),
            ],
            out_specs=pl.BlockSpec((b_tile, seq_tile, d_model),
                                   lambda b, s: (b, s, 0)),
        ),
        compiler_params=pltpu.CompilerParams(
            dimension_semantics=("parallel", "parallel"),
            vmem_limit_bytes=vmem_limit,
        ),
        cost_estimate=cost,
    )(x, pe_slice)


def build_sinusoidal_pe(max_len, d_model, dtype=jnp.float32):
    """Same construction as the PyTorch module's registered `pe` buffer."""
    position = jnp.arange(max_len, dtype=jnp.float32)[:, None]
    div_term = jnp.exp(
        jnp.arange(0, d_model, 2, dtype=jnp.float32) * (-math.log(10000.0) / d_model))
    angles = position * div_term                      # (max_len, d_model // 2)
    pe = jnp.zeros((max_len, d_model), dtype=jnp.float32)
    pe = pe.at[:, 0::2].set(jnp.sin(angles))
    pe = pe.at[:, 1::2].set(jnp.cos(angles))
    return pe.astype(dtype)


def _pos_enc_ref(x, pe, start_pos=0):
    seq = x.shape[1]
    return (x.astype(jnp.float32)
            + pe[start_pos:start_pos + seq, :][None, :, :].astype(jnp.float32)
            ).astype(x.dtype)


if __name__ == "__main__":
    key = jax.random.PRNGKey(0)

    batch, seq, d_model, max_len = 2, 8, 32, 64
    x = jax.random.normal(key, (batch, seq, d_model), dtype=jnp.float32)
    pe = build_sinusoidal_pe(max_len, d_model)
    start_pos = 3

    out = positional_encoding(x, pe, start_pos=start_pos)
    out = jax.block_until_ready(out)

    ref = _pos_enc_ref(x, pe, start_pos=start_pos)
    assert out.shape == x.shape
    assert jnp.allclose(out, ref, atol=1e-6, rtol=1e-6), "mismatch vs reference"

    print("KERNEL_OK")
</pallas_src>

<mosaic_0001>
module attributes {stable_mosaic.version = 11 : i64} {
  func.func @_pos_enc_kernel(%arg0: i32, %arg1: i32, %arg2: memref<2x8x32xf32, #tpu.memory_space<vmem>>, %arg3: memref<8x32xf32, #tpu.memory_space<vmem>>, %arg4: memref<2x8x32xf32, #tpu.memory_space<vmem>>) attributes {dimension_semantics = [#tpu.dimension_semantics<parallel>, #tpu.dimension_semantics<parallel>], iteration_bounds = array<i64: 1, 1>, scalar_prefetch = 0 : i64, scratch_operands = 0 : i64, tpu.core_type = #tpu.core_type<tc>, window_params = [{transform_indices = @transform_0, window_bounds = array<i64: 2, 8, 32>}, {transform_indices = @transform_1, window_bounds = array<i64: 8, 32>}, {transform_indices = @transform_2, window_bounds = array<i64: 2, 8, 32>}]} {
    %c0 = arith.constant 0 : index
    %c0_0 = arith.constant 0 : index
    %c0_1 = arith.constant 0 : index
    %0 = vector.load %arg2[%c0, %c0_0, %c0_1] : memref<2x8x32xf32, #tpu.memory_space<vmem>>, vector<2x8x32xf32>
    %c0_2 = arith.constant 0 : index
    %c0_3 = arith.constant 0 : index
    %1 = vector.load %arg3[%c0_2, %c0_3] : memref<8x32xf32, #tpu.memory_space<vmem>>, vector<8x32xf32>
    %2 = vector.shape_cast %1 : vector<8x32xf32> to vector<1x8x32xf32>
    %3 = vector.broadcast %2 : vector<1x8x32xf32> to vector<2x8x32xf32>
    %4 = arith.addf %0, %3 : vector<2x8x32xf32>
    %c0_4 = arith.constant 0 : index
    %c0_5 = arith.constant 0 : index
    %c0_6 = arith.constant 0 : index
    %5 = vector.load %arg4[%c0_4, %c0_5, %c0_6] : memref<2x8x32xf32, #tpu.memory_space<vmem>>, vector<2x8x32xf32>
    tpu.vector_store %arg4[%c0_4, %c0_5, %c0_6], %4 {strides = array<i32>} : memref<2x8x32xf32, #tpu.memory_space<vmem>>, vector<2x8x32xf32>,
    return
  }
  func.func @transform_0(%arg0: i32, %arg1: i32) -> (i32, i32, i32) {
    %c0_i32 = arith.constant 0 : i32
    %c0_i32_0 = arith.constant 0 : i32
    return %arg0, %arg1, %c0_i32 : i32, i32, i32
  }
  func.func @transform_1(%arg0: i32, %arg1: i32) -> (i32, i32) {
    %c0_i32 = arith.constant 0 : i32
    %c0_i32_0 = arith.constant 0 : i32
    return %arg1, %c0_i32 : i32, i32
  }
  func.func @transform_2(%arg0: i32, %arg1: i32) -> (i32, i32, i32) {
    %c0_i32 = arith.constant 0 : i32
    %c0_i32_0 = arith.constant 0 : i32
    return %arg0, %arg1, %c0_i32 : i32, i32, i32
  }
}

</mosaic_0001>

<llo_original>
// kernel: tpu_custom_call.1
$region0: #{tpu_custom_call.1}
  #allocation0 [shape = 'u32[]', space=smem, size = 0x4, offset = 0x4, fixed_abs, tag = 'smem constant byte address 0x4 - core index']
  #allocation1 [shape = 'u32[144,128]{1,0:T(1,128)}', space=vmem, size = 0x12000, scoped, tag = 'internal scratch']
  %s0 = inlined_call_operand.hbm [shape: f32[2,8,32], index: 0, kind: input, shape index: {}]
  %s1 = inlined_call_operand.hbm [shape: f32[8,32], index: 1, kind: input, shape index: {}]
  %s2 = inlined_call_operand.hbm [shape: f32[2,8,32], index: 2, kind: output, shape index: {}]
  %s3 = sld [smem:[#allocation0]]
  $region26: #{tpu_custom_call.1} parent=0
    _
  %s5 = ssub.s32 1, %s3
  %s6 = scalar_select 0, %s5, %s3
  $region1: #{tpu_custom_call.1} parent=0
    #allocation2 [shape = 'u8[8192]{0}', space=vmem, size = 0x2000, scoped, tag = 'input window, operand 0, single buffered']
    #allocation3 [shape = 's32[1]{0}', space=sflag, size = 0x4, scoped, tag = 'scoped memory for tpu_custom_call.1']
    #allocation4 [shape = 's32[1]{0}', space=sflag, size = 0x4, scoped, tag = 'scoped memory for tpu_custom_call.1']
    #allocation5 [shape = 'u8[4096]{0}', space=vmem, size = 0x1000, scoped, tag = 'input window, operand 1, single buffered']
    #allocation6 [shape = 's32[1]{0}', space=sflag, size = 0x4, scoped, tag = 'scoped memory for tpu_custom_call.1']
    #allocation7 [shape = 'u8[8192]{0}', space=vmem, size = 0x2000, scoped, tag = 'output window, operand 0, single buffered']
    %7 = vsyncpa [#allocation3], 0
    %8 = vsyncpa [#allocation6], 0
    %9 = vsyncpa [#allocation4], 0
    // Predicated region
    $region2: #{tpu_custom_call.1} parent=1 // pred_check
      _
    $region3: #{tpu_custom_call.1} parent=1 // pred_check_branch
      %11 = sbr.rel (0) target = $region5
    $region4: #{tpu_custom_call.1} parent=1 // pred_region
      %s13 = ssub.s32 256, 256
      %14 = vsyncadd [#allocation3], %s13
      %s15 = sshll.u32 [#allocation2], 4
      %s16 = int_to_ptr.vmem [resolvable:$true] %s15
      %21 = dma.hbm_to_vmem [thread:$0]  %s0, 256, %s16, [#allocation3], 128, 128, 8
    $region5: #{tpu_custom_call.1} parent=1 // pred_fallthru
      _
    // Predicated region
    $region6: #{tpu_custom_call.1} parent=1 // pred_check
      _
    $region7: #{tpu_custom_call.1} parent=1 // pred_check_branch
      %23 = sbr.rel (0) target = $region9
    $region8: #{tpu_custom_call.1} parent=1 // pred_region
      %s25 = ssub.s32 128, 128
      %26 = vsyncadd [#allocation6], %s25
      %s28 = sshll.u32 [#allocation5], 4
      %s29 = int_to_ptr.vmem [resolvable:$true] %s28
      %31 = dma.hbm_to_vmem [thread:$0]  %s1, 128, %s29, [#allocation6]
    $region9: #{tpu_custom_call.1} parent=1 // pred_fallthru
      _
    // Predicated region
    $region10: #{tpu_custom_call.1} parent=1 // pred_check
      _
    $region11: #{tpu_custom_call.1} parent=1 // pred_check_branch
      %33 = sbr.rel (0) target = $region13
    $region12: #{tpu_custom_call.1} parent=1 // pred_region
      %34 = dma.done [#allocation3], 256
    $region13: #{tpu_custom_call.1} parent=1 // pred_fallthru
      _
    // Predicated region
    $region14: #{tpu_custom_call.1} parent=1 // pred_check
      _
    $region15: #{tpu_custom_call.1} parent=1 // pred_check_branch
      %36 = sbr.rel (0) target = $region17
    $region16: #{tpu_custom_call.1} parent=1 // pred_region
      %37 = dma.done [#allocation6], 128
    $region17: #{tpu_custom_call.1} parent=1 // pred_fallthru
      _
    %v38 = vld [vmem:[#allocation2] sm:$0xff]
    %v39 = vld [vmem:[#allocation2 + $0x8] sm:$0xff]
    %v40 = vld [vmem:[#allocation5] sm:$0xff]
    %v41 = vadd.f32 %v38, %v40
    %v42 = vadd.f32 %v39, %v40
    %vm43 = vcmask 261120
    %44 = vst.msk [vmem:[#allocation7] sm:$0xff] %vm43, %v41
    %45 = vst.msk [vmem:[#allocation7 + $0x8] sm:$0xff] %vm43, %v42
    // Predicated region
    $region18: #{tpu_custom_call.1} parent=1 // pred_check
      _
    $region19: #{tpu_custom_call.1} parent=1 // pred_check_branch
      %47 = sbr.rel (0) target = $region21
    $region20: #{tpu_custom_call.1} parent=1 // pred_region
      %s49 = ssub.s32 256, 256
      %50 = vsyncadd [#allocation4], %s49
      %s51 = sshll.u32 [#allocation7], 4
      %s52 = int_to_ptr.vmem [resolvable:$true] %s51
      %57 = dma.vmem_to_hbm [thread:$0]  %s52, 256, %s2, [#allocation4], 128, 128, 8
    $region21: #{tpu_custom_call.1} parent=1 // pred_fallthru
      _
    // Predicated region
    $region22: #{tpu_custom_call.1} parent=1 // pred_check
      _
    $region23: #{tpu_custom_call.1} parent=1 // pred_check_branch
      %59 = sbr.rel (0) target = $region25
    $region24: #{tpu_custom_call.1} parent=1 // pred_region
      %60 = dma.done [#allocation4], 256
    $region25: #{tpu_custom_call.1} parent=1 // pred_fallthru
      _
    %61 = vsyncpa [#allocation3], 1
    %62 = vsyncpa [#allocation6], 1
    %63 = vsyncpa [#allocation4], 1

</llo_original>
